<compile_context>
chip_gen: v7x
topology: tpu7x:2x2x1
jax: 0.10.0
libtpu: 0.0.40
codegen_flags: <defaults>
</compile_context>

<pallas_src>
import functools

import jax
import jax.numpy as jnp
from jax import lax
from jax.experimental import pallas as pl
from jax.experimental.pallas import tpu as pltpu

_LANE = 128            # vreg lane width
_SUBLANE = 8           # vreg sublane count (f32)
_MAX_TILE_ROWS = 8192  # (8192, 128) block: 4 MiB f32-equivalent working set

# murmur3 fmix32 constants as signed int32 (software-PRNG fallback path only).
_M1 = -2049145189        # 0x85EBCA6B
_M2 = -1028477387        # 0xC2B2AE35
_SEED_MIX = -1640531535  # 0x9E3779B1


def _fmix32(k):
    """murmur3 finalizer on int32; logical right shifts emulated via mask."""
    k = k ^ ((k >> 16) & 0xFFFF)
    k = k * _M1
    k = k ^ ((k >> 13) & 0x7FFFF)
    k = k * _M2
    k = k ^ ((k >> 16) & 0xFFFF)
    return k


def _dropout_kernel_hw(seed_ref, x_ref, o_ref, *, threshold, scale):
    """TPU path: hardware PRNG (frees the VALU slot -> HBM-roofline bound)."""
    pltpu.prng_seed(seed_ref[0], pl.program_id(0))
    rbits = pltpu.prng_random_bits(x_ref.shape)
    if rbits.dtype != jnp.int32:          # trace-time branch; handle u32/i32
        rbits = pltpu.bitcast(rbits, jnp.int32)
    bits = rbits & 0x7FFFFFFF             # 31 uniform random bits per element
    keep = bits < threshold               # Bernoulli(keep_prob)

    # Inverted dropout; scale in f32 (exact 1/(1-p)), single cast on the store.
    y = x_ref[...].astype(jnp.float32) * scale
    o_ref[...] = jnp.where(keep, y, 0.0).astype(o_ref.dtype)


def _dropout_kernel_sw(seed_ref, x_ref, o_ref, *, threshold, scale, tile_rows):
    """Fallback path (interpret / non-TPU backends): counter-based hash."""
    shp = x_ref.shape                                    # (tile_rows, 128)
    row = lax.broadcasted_iota(jnp.int32, shp, 0)
    col = lax.broadcasted_iota(jnp.int32, shp, 1)
    gidx = (pl.program_id(0) * tile_rows + row) * shp[1] + col
    sk = _fmix32(seed_ref[0] * _SEED_MIX)
    bits = _fmix32(gidx ^ sk) & 0x7FFFFFFF
    keep = bits < threshold
    y = x_ref[...].astype(jnp.float32) * scale
    o_ref[...] = jnp.where(keep, y, 0.0).astype(o_ref.dtype)


def pallas_dropout(x, p: float = 0.5, seed: int = 0):
    if p < 0.0 or p > 1.0:
        raise ValueError(
            "dropout probability has to be between 0 and 1, but got {}.".format(p))
    if p == 0.0 or x.size == 0:
        return x
    if p == 1.0:
        # Reference module computes x*0/0 = NaN here; standard dropout
        # semantics return an all-zero output, which we use instead.
        return jnp.zeros_like(x)

    keep_prob = 1.0 - p
    threshold = min(int(keep_prob * (1 << 31)), (1 << 31) - 1)  # keep iff bits < threshold
    scale = 1.0 / keep_prob

    orig_shape = x.shape
    n = x.size

    # Lane/sublane-dense slab (rows, 128), rows a multiple of 8.  Padding (and
    # the matching output slice) only happens when n % 1024 != 0 — i.e. only
    # for small/odd shapes, never an extra HBM pass for big aligned tensors.
    rows = pl.cdiv(n, _LANE)
    rows = ((rows + _SUBLANE - 1) // _SUBLANE) * _SUBLANE
    n_pad = rows * _LANE

    flat = x.reshape(-1)
    if n_pad != n:
        flat = jnp.pad(flat, (0, n_pad - n))
    x2 = flat.reshape(rows, _LANE)

    # ~4 MiB blocks; last block may be partial (Pallas masks it).  Row-based
    # cap: random bits / f32 intermediates are 4 B/element regardless of the
    # input dtype, so rows (not input bytes) set the per-step VMEM footprint.
    tile_rows = min(_MAX_TILE_ROWS, rows)
    grid = (pl.cdiv(rows, tile_rows),)

    use_hw_prng = jax.default_backend() == "tpu"
    if use_hw_prng:
        kernel = functools.partial(
            _dropout_kernel_hw, threshold=threshold, scale=scale)
    else:
        kernel = functools.partial(
            _dropout_kernel_sw, threshold=threshold, scale=scale,
            tile_rows=tile_rows)

    seed_arr = jnp.asarray([int(seed) % (1 << 31)], dtype=jnp.int32)

    out2 = pl.pallas_call(
        kernel,
        out_shape=jax.ShapeDtypeStruct((rows, _LANE), x.dtype),
        grid_spec=pltpu.PrefetchScalarGridSpec(
            num_scalar_prefetch=1,
            grid=grid,
            in_specs=[pl.BlockSpec((tile_rows, _LANE), lambda i, sref: (i, 0))],
            out_specs=pl.BlockSpec((tile_rows, _LANE), lambda i, sref: (i, 0)),
        ),
        compiler_params=pltpu.CompilerParams(
            dimension_semantics=("parallel",),      # shard blocks across TCs on v7x
            vmem_limit_bytes=48 * 1024 * 1024,      # headroom on v7x's 64 MiB VMEM
        ),
    )(seed_arr, x2)

    out = out2.reshape(-1)
    if n_pad != n:
        out = out[:n]
    return out.reshape(orig_shape)


if __name__ == "__main__":
    key = jax.random.PRNGKey(0)
    # NCHW input, matching a typical PyTorch layout.
    x = jax.random.normal(key, (2, 4, 16, 16), dtype=jnp.float32)

    p = 0.5
    y = pallas_dropout(x, p=p, seed=1234)
    y = jax.block_until_ready(y)

    # Sanity: shape/dtype preserved, survivors scaled by 1/(1-p), ~p dropped.
    assert y.shape == x.shape and y.dtype == x.dtype
    kept = y != 0.0  # note: misclassifies exact zeros in x; fine for gaussian input
    scaled_ok = jnp.allclose(jnp.where(kept, y, 0.0),
                             jnp.where(kept, x / (1.0 - p), 0.0),
                             rtol=1e-6, atol=1e-6)
    frac_kept = float(jnp.mean(kept.astype(jnp.float32)))
    assert bool(scaled_ok), "surviving elements not scaled by 1/(1-p)"
    assert 0.3 < frac_kept < 0.7, f"keep fraction {frac_kept} far from 0.5"

    # Exercise the padding path (size not a multiple of 1024).
    x_odd = jax.random.normal(jax.random.PRNGKey(1), (3, 5, 7), dtype=jnp.float32)
    y_odd = jax.block_until_ready(pallas_dropout(x_odd, p=p, seed=7))
    assert y_odd.shape == x_odd.shape and y_odd.dtype == x_odd.dtype
    kept_odd = y_odd != 0.0
    assert bool(jnp.allclose(jnp.where(kept_odd, y_odd, 0.0),
                             jnp.where(kept_odd, x_odd / (1.0 - p), 0.0),
                             rtol=1e-6, atol=1e-6))

    # Exercise the multi-block path (rows > tile_rows would need a big tensor;
    # instead check a non-tile-aligned but 1024-aligned size runs without pad).
    x_big = jax.random.normal(jax.random.PRNGKey(2), (8, 3, 32, 32), dtype=jnp.float32)
    y_big = jax.block_until_ready(pallas_dropout(x_big, p=0.3, seed=42))
    assert y_big.shape == x_big.shape

    print("KERNEL_OK")
</pallas_src>

<mosaic_0001>
module attributes {stable_mosaic.version = 11 : i64} {
  func.func @_dropout_kernel_sw(%arg0: i32, %arg1: memref<1xi32, #tpu.memory_space<smem>>, %arg2: memref<16x128xf32, #tpu.memory_space<vmem>>, %arg3: memref<16x128xf32, #tpu.memory_space<vmem>>) attributes {dimension_semantics = [#tpu.dimension_semantics<parallel>], iteration_bounds = array<i64: 1>, scalar_prefetch = 1 : i64, scratch_operands = 0 : i64, tpu.core_type = #tpu.core_type<tc>, window_params = [{transform_indices = @transform_0, window_bounds = array<i64: 16, 128>}, {transform_indices = @transform_1, window_bounds = array<i64: 16, 128>}]} {
    %0 = tpu.iota {dimensions = array<i32: 0>} : vector<16x128xi32>
    %1 = tpu.iota {dimensions = array<i32: 1>} : vector<16x128xi32>
    %c16_i32 = arith.constant 16 : i32
    %2 = arith.muli %arg0, %c16_i32 : i32
    %3 = vector.broadcast %2 : i32 to vector<16x128xi32>
    %4 = arith.addi %3, %0 : vector<16x128xi32>
    %c128_i32 = arith.constant 128 : i32
    %5 = vector.broadcast %c128_i32 : i32 to vector<16x128xi32>
    %6 = arith.muli %4, %5 : vector<16x128xi32>
    %7 = arith.addi %6, %1 : vector<16x128xi32>
    %c0 = arith.constant 0 : index
    %8 = memref.load %arg1[%c0] : memref<1xi32, #tpu.memory_space<smem>>
    %c-1640531535_i32 = arith.constant -1640531535 : i32
    %9 = arith.muli %8, %c-1640531535_i32 : i32
    %c16_i32_0 = arith.constant 16 : i32
    %10 = arith.shrsi %9, %c16_i32_0 : i32
    %c65535_i32 = arith.constant 65535 : i32
    %11 = arith.andi %10, %c65535_i32 : i32
    %12 = arith.xori %9, %11 : i32
    %c-2049145189_i32 = arith.constant -2049145189 : i32
    %13 = arith.muli %12, %c-2049145189_i32 : i32
    %c13_i32 = arith.constant 13 : i32
    %14 = arith.shrsi %13, %c13_i32 : i32
    %c524287_i32 = arith.constant 524287 : i32
    %15 = arith.andi %14, %c524287_i32 : i32
    %16 = arith.xori %13, %15 : i32
    %c-1028477387_i32 = arith.constant -1028477387 : i32
    %17 = arith.muli %16, %c-1028477387_i32 : i32
    %c16_i32_1 = arith.constant 16 : i32
    %18 = arith.shrsi %17, %c16_i32_1 : i32
    %c65535_i32_2 = arith.constant 65535 : i32
    %19 = arith.andi %18, %c65535_i32_2 : i32
    %20 = arith.xori %17, %19 : i32
    %21 = vector.broadcast %20 : i32 to vector<16x128xi32>
    %22 = arith.xori %7, %21 : vector<16x128xi32>
    %c16_i32_3 = arith.constant 16 : i32
    %23 = vector.broadcast %c16_i32_3 : i32 to vector<16x128xi32>
    %24 = arith.shrsi %22, %23 : vector<16x128xi32>
    %c65535_i32_4 = arith.constant 65535 : i32
    %25 = vector.broadcast %c65535_i32_4 : i32 to vector<16x128xi32>
    %26 = arith.andi %24, %25 : vector<16x128xi32>
    %27 = arith.xori %22, %26 : vector<16x128xi32>
    %c-2049145189_i32_5 = arith.constant -2049145189 : i32
    %28 = vector.broadcast %c-2049145189_i32_5 : i32 to vector<16x128xi32>
    %29 = arith.muli %27, %28 : vector<16x128xi32>
    %c13_i32_6 = arith.constant 13 : i32
    %30 = vector.broadcast %c13_i32_6 : i32 to vector<16x128xi32>
    %31 = arith.shrsi %29, %30 : vector<16x128xi32>
    %c524287_i32_7 = arith.constant 524287 : i32
    %32 = vector.broadcast %c524287_i32_7 : i32 to vector<16x128xi32>
    %33 = arith.andi %31, %32 : vector<16x128xi32>
    %34 = arith.xori %29, %33 : vector<16x128xi32>
    %c-1028477387_i32_8 = arith.constant -1028477387 : i32
    %35 = vector.broadcast %c-1028477387_i32_8 : i32 to vector<16x128xi32>
    %36 = arith.muli %34, %35 : vector<16x128xi32>
    %c16_i32_9 = arith.constant 16 : i32
    %37 = vector.broadcast %c16_i32_9 : i32 to vector<16x128xi32>
    %38 = arith.shrsi %36, %37 : vector<16x128xi32>
    %c65535_i32_10 = arith.constant 65535 : i32
    %39 = vector.broadcast %c65535_i32_10 : i32 to vector<16x128xi32>
    %40 = arith.andi %38, %39 : vector<16x128xi32>
    %41 = arith.xori %36, %40 : vector<16x128xi32>
    %c2147483647_i32 = arith.constant 2147483647 : i32
    %42 = vector.broadcast %c2147483647_i32 : i32 to vector<16x128xi32>
    %43 = arith.andi %41, %42 : vector<16x128xi32>
    %c1073741824_i32 = arith.constant 1073741824 : i32
    %44 = vector.broadcast %c1073741824_i32 : i32 to vector<16x128xi32>
    %45 = arith.cmpi slt, %43, %44 : vector<16x128xi32>
    %c0_11 = arith.constant 0 : index
    %c0_12 = arith.constant 0 : index
    %46 = vector.load %arg2[%c0_11, %c0_12] : memref<16x128xf32, #tpu.memory_space<vmem>>, vector<16x128xf32>
    %cst = arith.constant 2.000000e+00 : f32
    %47 = vector.broadcast %cst : f32 to vector<16x128xf32>
    %48 = arith.mulf %46, %47 : vector<16x128xf32>
    %cst_13 = arith.constant 0.000000e+00 : f32
    %49 = vector.broadcast %cst_13 : f32 to vector<16x128xf32>
    %50 = arith.select %45, %48, %49 : vector<16x128xi1>, vector<16x128xf32>
    %c0_14 = arith.constant 0 : index
    %c0_15 = arith.constant 0 : index
    %51 = vector.load %arg3[%c0_14, %c0_15] : memref<16x128xf32, #tpu.memory_space<vmem>>, vector<16x128xf32>
    tpu.vector_store %arg3[%c0_14, %c0_15], %50 {strides = array<i32>} : memref<16x128xf32, #tpu.memory_space<vmem>>, vector<16x128xf32>,
    return
  }
  func.func @transform_0(%arg0: i32, %arg1: memref<1xi32, #tpu.memory_space<smem>>) -> (i32, i32) {
    %c0_i32 = arith.constant 0 : i32
    %c0_i32_0 = arith.constant 0 : i32
    return %arg0, %c0_i32 : i32, i32
  }
  func.func @transform_1(%arg0: i32, %arg1: memref<1xi32, #tpu.memory_space<smem>>) -> (i32, i32) {
    %c0_i32 = arith.constant 0 : i32
    %c0_i32_0 = arith.constant 0 : i32
    return %arg0, %c0_i32 : i32, i32
  }
}

</mosaic_0001>

<llo_original>
// kernel: tpu_custom_call.1
$region0: #{tpu_custom_call.1}
  #allocation0 [shape = 'u32[]', space=smem, size = 0x4, offset = 0x4, fixed_abs, tag = 'smem constant byte address 0x4 - core index']
  #allocation1 [shape = 'u32[144,128]{1,0:T(1,128)}', space=vmem, size = 0x12000, scoped, tag = 'internal scratch']
  #allocation2 [shape = 's32[1]{0}', space=sflag, size = 0x4, scoped, tag = 'scoped memory for tpu_custom_call.1']
  #allocation3 [shape = 's32[1]{0:T(128)S(6)}', space=smem, size = 0x200, scoped, tag = 'prefetched SMEM operand 0']
  %s0 = inlined_call_operand.<no memory space> [shape: s32[1], index: 0, kind: input, shape index: {}]
  %s1 = inlined_call_operand.hbm [shape: f32[16,128], index: 1, kind: input, shape index: {}]
  %s2 = inlined_call_operand.hbm [shape: f32[16,128], index: 2, kind: output, shape index: {}]
  %s3 = sld [smem:[#allocation0]]
  $region18: #{tpu_custom_call.1} parent=0
    _
  %s5 = ssub.s32 1, %s3
  %s6 = scalar_select 0, %s5, %s3
  %7 = sst [smem:[#allocation3]] %s0
  $region1: #{tpu_custom_call.1} parent=0
    #allocation4 [shape = 'u8[8192]{0}', space=vmem, size = 0x2000, scoped, tag = 'input window, operand 1, single buffered']
    #allocation5 [shape = 's32[1]{0}', space=sflag, size = 0x4, scoped, tag = 'scoped memory for tpu_custom_call.1']
    #allocation6 [shape = 's32[1]{0}', space=sflag, size = 0x4, scoped, tag = 'scoped memory for tpu_custom_call.1']
    #allocation7 [shape = 'u8[8192]{0}', space=vmem, size = 0x2000, scoped, tag = 'output window, operand 0, single buffered']
    %8 = vsyncpa [#allocation5], 0
    %9 = vsyncpa [#allocation6], 0
    // Predicated region
    $region2: #{tpu_custom_call.1} parent=1 // pred_check
      _
    $region3: #{tpu_custom_call.1} parent=1 // pred_check_branch
      %11 = sbr.rel (0) target = $region5
    $region4: #{tpu_custom_call.1} parent=1 // pred_region
      %s13 = ssub.s32 256, 256
      %14 = vsyncadd [#allocation5], %s13
      %s15 = sshll.u32 [#allocation4], 4
      %s16 = int_to_ptr.vmem [resolvable:$true] %s15
      %21 = dma.hbm_to_vmem [thread:$0]  %s1, 256, %s16, [#allocation5], 128, 128, 8
    $region5: #{tpu_custom_call.1} parent=1 // pred_fallthru
      _
    // Predicated region
    $region6: #{tpu_custom_call.1} parent=1 // pred_check
      _
    $region7: #{tpu_custom_call.1} parent=1 // pred_check_branch
      %23 = sbr.rel (0) target = $region9
    $region8: #{tpu_custom_call.1} parent=1 // pred_region
      %24 = dma.done [#allocation5], 256
    $region9: #{tpu_custom_call.1} parent=1 // pred_fallthru
      _
    %v25 = vlaneseq
    %v26 = vshrl.u32 %v25, 7
    %v27 = vadd.s32 %v26, 8
    %v28 = vlaneseq
    %v29 = vand.u32 %v28, 127
    %s30 = smul.u32 0, 16
    %v31 = vstv %s30
    %v32 = vadd.s32 %v31, %v26
    %v33 = vadd.s32 %v31, %v27
    %v34 = vmul.u32 %v32, 128
    %v35 = vmul.u32 %v33, 128
    %v36 = vadd.s32 %v34, %v29
    %v37 = vadd.s32 %v35, %v29
    %s38 = sld [smem:[#allocation3]]
    %s39 = smul.u32 %s38, 2654435761
    %s40 = sshra.s32 %s39, 16
    %s41 = sand.u32 %s40, 65535
    %s42 = sxor.u32 %s39, %s41
    %s43 = smul.u32 %s42, 2245822107
    %s44 = sshra.s32 %s43, 13
    %s45 = sand.u32 %s44, 524287
    %s46 = sxor.u32 %s43, %s45
    %s47 = smul.u32 %s46, 3266489909
    %s48 = sshra.s32 %s47, 16
    %s49 = sand.u32 %s48, 65535
    %s50 = sxor.u32 %s47, %s49
    %v51 = vstv %s50
    %v52 = vxor.u32 %v36, %v51
    %v53 = vxor.u32 %v37, %v51
    %v54 = vshra.s32 %v52, 16
    %v55 = vshra.s32 %v53, 16
    %v56 = vand.u32 %v54, 65535
    %v57 = vand.u32 %v55, 65535
    %v58 = vxor.u32 %v52, %v56
    %v59 = vxor.u32 %v53, %v57
    %v60 = vmul.u32 %v58, 2245822107
    %v61 = vmul.u32 %v59, 2245822107
    %v62 = vshra.s32 %v60, 13
    %v63 = vshra.s32 %v61, 13
    %v64 = vand.u32 %v62, 524287
    %v65 = vand.u32 %v63, 524287
    %v66 = vxor.u32 %v60, %v64
    %v67 = vxor.u32 %v61, %v65
    %v68 = vmul.u32 %v66, 3266489909
    %v69 = vmul.u32 %v67, 3266489909
    %v70 = vshra.s32 %v68, 16
    %v71 = vshra.s32 %v69, 16
    %v72 = vand.u32 %v70, 65535
    %v73 = vand.u32 %v71, 65535
    %v74 = vxor.u32 %v68, %v72
    %v75 = vxor.u32 %v69, %v73
    %v76 = vand.u32 %v74, 2147483647
    %v77 = vand.u32 %v75, 2147483647
    %vm78 = vcmp.lt.s32.totalorder %v76, 1073741824
    %vm79 = vcmp.lt.s32.totalorder %v77, 1073741824
    %v80 = vld [vmem:[#allocation4] sm:$0xff]
    %v81 = vld [vmem:[#allocation4 + $0x8] sm:$0xff]
    %v82 = vmul.f32 %v80, 2.0
    %v83 = vmul.f32 %v81, 2.0
    %v84 = vsel %vm78, %v82, 0.0
    %v85 = vsel %vm79, %v83, 0.0
    %86 = vst [vmem:[#allocation7] sm:$0xff] %v84
    %87 = vst [vmem:[#allocation7 + $0x8] sm:$0xff] %v85
    // Predicated region
    $region10: #{tpu_custom_call.1} parent=1 // pred_check
      _
    $region11: #{tpu_custom_call.1} parent=1 // pred_check_branch
      %89 = sbr.rel (0) target = $region13
    $region12: #{tpu_custom_call.1} parent=1 // pred_region
      %s91 = ssub.s32 256, 256
      %92 = vsyncadd [#allocation6], %s91
      %s93 = sshll.u32 [#allocation7], 4
      %s94 = int_to_ptr.vmem [resolvable:$true] %s93
      %99 = dma.vmem_to_hbm [thread:$0]  %s94, 256, %s2, [#allocation6], 128, 128, 8
    $region13: #{tpu_custom_call.1} parent=1 // pred_fallthru
      _
    // Predicated region
    $region14: #{tpu_custom_call.1} parent=1 // pred_check
      _
    $region15: #{tpu_custom_call.1} parent=1 // pred_check_branch
      %101 = sbr.rel (0) target = $region17
    $region16: #{tpu_custom_call.1} parent=1 // pred_region
      %102 = dma.done [#allocation6], 256
    $region17: #{tpu_custom_call.1} parent=1 // pred_fallthru
      _
    %103 = vsyncpa [#allocation5], 1
    %104 = vsyncpa [#allocation6], 1

</llo_original>
